<compile_context>
chip_gen: v7x
topology: tpu7x:2x2x1
jax: 0.10.0
libtpu: 0.0.40
codegen_flags: <defaults>
</compile_context>

<pallas_src>
from functools import partial

import jax
import jax.numpy as jnp
from jax.experimental import pallas as pl
from jax.experimental.pallas import tpu as pltpu


# ----------------------------------------------------------------------------
# Kernel: one affine map per batch tile.
#   w_ref : [11, 4]       f32  (resident: same block every grid step)
#   b_ref : [1, 4]        f32  (resident)
#   x_ref : [tile_b, 11]  f32  (batch tile)
#   o_ref : [tile_b, 4]   f32
# ----------------------------------------------------------------------------
def _affine_kernel(w_ref, b_ref, x_ref, o_ref):
    o_ref[...] = (
        jnp.dot(x_ref[...], w_ref[...], preferred_element_type=jnp.float32)
        + b_ref[...]
    )


def _round_up(n, m):
    return ((n + m - 1) // m) * m


# ----------------------------------------------------------------------------
# One-time param prep: fold the 4 activation-free Linears into a single
# affine map (W_eff, b_eff).  Weights stored as [in, out] so y = x @ W + b.
# ----------------------------------------------------------------------------
def fold_params(params):
    w1, b1, w2, b2, w3, b3, w4, b4 = params
    w_eff = ((w1 @ w2) @ w3) @ w4                       # [11, 4] f32
    b_eff = ((b1 @ w2 + b2) @ w3 + b3) @ w4 + b4        # [1, 4]  f32
    return w_eff.astype(jnp.float32), b_eff.astype(jnp.float32)


# ----------------------------------------------------------------------------
# Forward pass.  x: [B, 11] float32, returns [B, 4] float32.
# ----------------------------------------------------------------------------
@partial(jax.jit, static_argnames=("tile_b",))
def net_firewall_forward(x, w_eff, b_eff, tile_b=16384):
    B = x.shape[0]

    # Tile must be a multiple of 8 (sublane); shrink it for small batches.
    tb = min(tile_b, _round_up(B, 8))
    tb = _round_up(tb, 8)
    Bp = _round_up(B, tb)
    if Bp != B:
        x = jnp.pad(x, ((0, Bp - B), (0, 0)))           # only when ragged

    out = pl.pallas_call(
        _affine_kernel,
        out_shape=jax.ShapeDtypeStruct((Bp, 4), jnp.float32),
        grid=(Bp // tb,),
        in_specs=[
            pl.BlockSpec((11, 4), lambda i: (0, 0)),    # W_eff   (resident)
            pl.BlockSpec((1, 4), lambda i: (0, 0)),     # b_eff   (resident)
            pl.BlockSpec((tb, 11), lambda i: (i, 0)),   # x batch tile
        ],
        out_specs=pl.BlockSpec((tb, 4), lambda i: (i, 0)),
        compiler_params=pltpu.CompilerParams(
            # Batch tiles are independent: shard across TensorCores on v7x;
            # harmless no-op on v5e/v6e.
            dimension_semantics=("parallel",),
        ),
    )(w_eff, b_eff, x)

    return out[:B] if Bp != B else out


# ----------------------------------------------------------------------------
# Param init (deterministic, mimics PyTorch nn.Linear default init) and a
# plain-JAX unfused reference of the original 4-layer module.
# ----------------------------------------------------------------------------
def init_params(key):
    dims = [(11, 32), (32, 64), (64, 32), (32, 4)]
    params = []
    for fan_in, fan_out in dims:
        key, kw, kb = jax.random.split(key, 3)
        bound = 1.0 / jnp.sqrt(jnp.float32(fan_in))
        w = jax.random.uniform(kw, (fan_in, fan_out), jnp.float32,
                               minval=-bound, maxval=bound)
        b = jax.random.uniform(kb, (1, fan_out), jnp.float32,
                               minval=-bound, maxval=bound)
        params += [w, b]
    return tuple(params)


def reference_forward(x, params):
    w1, b1, w2, b2, w3, b3, w4, b4 = params
    h = x @ w1 + b1
    h = h @ w2 + b2
    h = h @ w3 + b3
    return h @ w4 + b4


if __name__ == "__main__":
    # TODO(synk): the sklearn StandardScaler preprocessing in the original
    # script is outside the nn.Module forward and is not reproduced here.
    key = jax.random.PRNGKey(0)
    key, kx = jax.random.split(key)

    B = 256                                   # small test batch
    x = jax.random.normal(kx, (B, 11), dtype=jnp.float32)

    params = init_params(key)
    w_eff, b_eff = fold_params(params)        # one-time fold (param prep)

    # tile_b=128 -> grid of 2 batch tiles (exercises the pipelined grid).
    out = net_firewall_forward(x, w_eff, b_eff, tile_b=128)
    out = jax.block_until_ready(out)
    assert out.shape == (B, 4)

    # Check against the original unfused f32 4-layer reference (all-f32 math;
    # only the association order of the matmuls differs).
    ref = reference_forward(x, params)
    assert jnp.allclose(out, ref, atol=1e-3, rtol=1e-3)

    # Ragged / tiny batch: exercises the pad-to-tile + slice path.
    out_small = net_firewall_forward(x[:37], w_eff, b_eff, tile_b=128)
    out_small = jax.block_until_ready(out_small)
    assert out_small.shape == (37, 4)
    assert jnp.allclose(out_small, ref[:37], atol=1e-3, rtol=1e-3)

    print("KERNEL_OK")
</pallas_src>

<mosaic_0001>
module attributes {stable_mosaic.version = 11 : i64} {
  func.func @_affine_kernel(%arg0: i32, %arg1: memref<11x4xf32, #tpu.memory_space<vmem>>, %arg2: memref<1x4xf32, #tpu.memory_space<vmem>>, %arg3: memref<128x11xf32, #tpu.memory_space<vmem>>, %arg4: memref<128x4xf32, #tpu.memory_space<vmem>>) attributes {dimension_semantics = [#tpu.dimension_semantics<parallel>], iteration_bounds = array<i64: 2>, scalar_prefetch = 0 : i64, scratch_operands = 0 : i64, tpu.core_type = #tpu.core_type<tc>, window_params = [{pipeline_mode = #tpu.pipeline_mode<synchronous>, transform_indices = @transform_0, window_bounds = array<i64: 11, 4>}, {pipeline_mode = #tpu.pipeline_mode<synchronous>, transform_indices = @transform_1, window_bounds = array<i64: 1, 4>}, {transform_indices = @transform_2, window_bounds = array<i64: 128, 11>}, {transform_indices = @transform_3, window_bounds = array<i64: 128, 4>}]} {
    %c0 = arith.constant 0 : index
    %c0_0 = arith.constant 0 : index
    %0 = vector.load %arg3[%c0, %c0_0] : memref<128x11xf32, #tpu.memory_space<vmem>>, vector<128x11xf32>
    %c0_1 = arith.constant 0 : index
    %c0_2 = arith.constant 0 : index
    %1 = vector.load %arg1[%c0_1, %c0_2] : memref<11x4xf32, #tpu.memory_space<vmem>>, vector<11x4xf32>
    %cst = arith.constant dense<0.000000e+00> : vector<128x4xf32>
    %2 = tpu.matmul %0, %1, %cst {dimension_numbers = #tpu.dot_dimension_numbers<[1], [0], [0], [1], [0, 0, 1, 1], [], []>} : vector<128x11xf32>, vector<11x4xf32>, vector<128x4xf32> -> vector<128x4xf32>
    %c0_3 = arith.constant 0 : index
    %c0_4 = arith.constant 0 : index
    %3 = vector.load %arg2[%c0_3, %c0_4] : memref<1x4xf32, #tpu.memory_space<vmem>>, vector<1x4xf32>
    %4 = vector.broadcast %3 : vector<1x4xf32> to vector<128x4xf32>
    %5 = arith.addf %2, %4 : vector<128x4xf32>
    %c0_5 = arith.constant 0 : index
    %c0_6 = arith.constant 0 : index
    %6 = vector.load %arg4[%c0_5, %c0_6] : memref<128x4xf32, #tpu.memory_space<vmem>>, vector<128x4xf32>
    tpu.vector_store %arg4[%c0_5, %c0_6], %5 {strides = array<i32>} : memref<128x4xf32, #tpu.memory_space<vmem>>, vector<128x4xf32>,
    return
  }
  func.func @transform_0(%arg0: i32) -> (i32, i32) {
    %c0_i32 = arith.constant 0 : i32
    %c0_i32_0 = arith.constant 0 : i32
    %c0_i32_1 = arith.constant 0 : i32
    return %c0_i32, %c0_i32_0 : i32, i32
  }
  func.func @transform_1(%arg0: i32) -> (i32, i32) {
    %c0_i32 = arith.constant 0 : i32
    %c0_i32_0 = arith.constant 0 : i32
    %c0_i32_1 = arith.constant 0 : i32
    return %c0_i32, %c0_i32_0 : i32, i32
  }
  func.func @transform_2(%arg0: i32) -> (i32, i32) {
    %c0_i32 = arith.constant 0 : i32
    %c0_i32_0 = arith.constant 0 : i32
    return %arg0, %c0_i32 : i32, i32
  }
  func.func @transform_3(%arg0: i32) -> (i32, i32) {
    %c0_i32 = arith.constant 0 : i32
    %c0_i32_0 = arith.constant 0 : i32
    return %arg0, %c0_i32 : i32, i32
  }
}

</mosaic_0001>

<llo_original>
// kernel: net_firewall_forward.1
$region0: #{net_firewall_forward.1}
  #allocation0 [shape = 'u32[]', space=smem, size = 0x4, offset = 0x4, fixed_abs, tag = 'smem constant byte address 0x4 - core index']
  #allocation1 [shape = 'u32[144,128]{1,0:T(1,128)}', space=vmem, size = 0x12000, scoped, tag = 'internal scratch']
  %s0 = inlined_call_operand.vmem [shape: f32[11,4], index: 0, kind: input, shape index: {}]
  %s1 = inlined_call_operand.vmem [shape: f32[1,4], index: 1, kind: input, shape index: {}]
  %s2 = inlined_call_operand.vmem [shape: f32[256,11], index: 2, kind: input, shape index: {}]
  %s3 = inlined_call_operand.vmem [shape: f32[256,4], index: 3, kind: output, shape index: {}]
  %s4 = sld [smem:[#allocation0]]
  $region45: #{net_firewall_forward.1} parent=0
    _
  %s6 = ssub.s32 1, %s4
  %s7 = scalar_select 0, %s6, %s4
  loop: start=0, step=1, limit=4
  $region2: #{net_firewall_forward.1} parent=0 // loop_pre_header
    _
  $region3: #{net_firewall_forward.1} parent=0 // loop_header
    %s9 = sphi 0, %s13
    %p10 = scmp.ge.s32.totalorder %s9, 4
    %s17 = sphi 0, %s17
    %s19 = sphi 0, %s17
    %s20 = sphi 0, %s19
    %s34 = sphi 0, %s20
    %s38 = sphi 0, %s38
    %s40 = sphi 0, %s38
    %s41 = sphi 0, %s40
    %s55 = sphi 0, %s41
    %s61 = sphi 0, %s63
    %s64 = sphi 0, %s61
    %s65 = sphi 0, %s64
    %s81 = sphi 0, %s65
    %s87 = sphi 0, %s89
    %s90 = sphi 0, %s87
    %s91 = sphi 0, %s90
    %s107 = sphi 0, %s91
  $region4: #{net_firewall_forward.1} parent=0 // loop_header_branch
    %12 = sbr.rel (%p10) target = $region8
  $region5: #{net_firewall_forward.1} parent=0 // loop_body
    %s14 = ssub.s32 %s9, 1
    %s15 = ssub.s32 %s9, 2
    %s16 = sadd.s32 %s9, 1
    %s18 = sadd.s32 %s17, 1
    %p21 = scmp.eq.s32.totalorder %s9, 1
    %p22 = scmp.ne.s32.totalorder %s17, %s19
    %p23 = scmp.eq.s32.totalorder %s9, 0
    %p24 = por %p22, %p23
    %p25 = scmp.ne.s32.totalorder %s17, %s19
    %p26 = scmp.eq.s32.totalorder %s14, 1
    %p27 = por %p25, %p26
    %p28 = scmp.ne.s32.totalorder %s19, %s20
    %p29 = scmp.eq.s32.totalorder %s14, 0
    %p30 = por %p28, %p29
    %p31 = scmp.ne.s32.totalorder %s19, %s20
    %p32 = scmp.eq.s32.totalorder %s15, 1
    %p33 = por %p31, %p32
    %p35 = scmp.ne.s32.totalorder %s20, %s34
    %p36 = scmp.eq.s32.totalorder %s15, 0
    %p37 = por %p35, %p36
    %s39 = sadd.s32 %s38, 1
    %p42 = scmp.eq.s32.totalorder %s9, 1
    %p43 = scmp.ne.s32.totalorder %s38, %s40
    %p44 = scmp.eq.s32.totalorder %s9, 0
    %p45 = por %p43, %p44
    %p46 = scmp.ne.s32.totalorder %s38, %s40
    %p47 = scmp.eq.s32.totalorder %s14, 1
    %p48 = por %p46, %p47
    %p49 = scmp.ne.s32.totalorder %s40, %s41
    %p50 = scmp.eq.s32.totalorder %s14, 0
    %p51 = por %p49, %p50
    %p52 = scmp.ne.s32.totalorder %s40, %s41
    %p53 = scmp.eq.s32.totalorder %s15, 1
    %p54 = por %p52, %p53
    %p56 = scmp.ne.s32.totalorder %s41, %s55
    %p57 = scmp.eq.s32.totalorder %s15, 0
    %p58 = por %p56, %p57
    %s59 = ssub.s32 %s9, %s16
    %p60 = scmp.eq.s32.totalorder %s59, 0
    %s62 = sadd.s32 %s61, 1
    %s63 = scalar_select %p60, %s61, %s62
    %p66 = pneg %p60
    %p67 = scmp.eq.s32.totalorder %s9, 1
    %p68 = por %p66, %p67
    %p69 = scmp.ne.s32.totalorder %s61, %s64
    %p70 = scmp.eq.s32.totalorder %s9, 0
    %p71 = por %p69, %p70
    %p72 = scmp.ne.s32.totalorder %s61, %s64
    %p73 = scmp.eq.s32.totalorder %s14, 1
    %p74 = por %p72, %p73
    %p75 = scmp.ne.s32.totalorder %s64, %s65
    %p76 = scmp.eq.s32.totalorder %s14, 0
    %p77 = por %p75, %p76
    %p78 = scmp.ne.s32.totalorder %s64, %s65
    %p79 = scmp.eq.s32.totalorder %s15, 1
    %p80 = por %p78, %p79
    %p82 = scmp.ne.s32.totalorder %s65, %s81
    %p83 = scmp.eq.s32.totalorder %s15, 0
    %p84 = por %p82, %p83
    %s85 = ssub.s32 %s9, %s16
    %p86 = scmp.eq.s32.totalorder %s85, 0
    %s88 = sadd.s32 %s87, 1
    %s89 = scalar_select %p86, %s87, %s88
    %p92 = pneg %p86
    %p93 = scmp.eq.s32.totalorder %s9, 1
    %p94 = por %p92, %p93
    %p95 = scmp.ne.s32.totalorder %s87, %s90
    %p96 = scmp.eq.s32.totalorder %s9, 0
    %p97 = por %p95, %p96
    %p98 = scmp.ne.s32.totalorder %s87, %s90
    %p99 = scmp.eq.s32.totalorder %s14, 1
    %p100 = por %p98, %p99
    %p101 = scmp.ne.s32.totalorder %s90, %s91
    %p102 = scmp.eq.s32.totalorder %s14, 0
    %p103 = por %p101, %p102
    %p104 = scmp.ne.s32.totalorder %s90, %s91
    %p105 = scmp.eq.s32.totalorder %s15, 1
    %p106 = por %p104, %p105
    %p108 = scmp.ne.s32.totalorder %s91, %s107
    %p109 = scmp.eq.s32.totalorder %s15, 0
    %p110 = por %p108, %p109
    %p111 = scmp.le.s32.totalorder 1, %s9
    %p112 = scmp.lt.s32.totalorder %s9, 3
    %p113 = pnand %p111, %p112
    %p114 = pneg %p113
    // Predicated region
    $region9: #{net_firewall_forward.1} parent=5 // pred_check
      _
    $region10: #{net_firewall_forward.1} parent=5 // pred_check_branch
      %116 = sbr.rel (%p113) target = $region12
    $region11: #{net_firewall_forward.1} parent=5 // pred_region
      %s117 = ssub.s32 %s9, 1
      // Predicated region
      $region13: #{net_firewall_forward.1} parent=11 // pred_check
        %p118 = pneg %p30
      $region14: #{net_firewall_forward.1} parent=11 // pred_check_branch
        %120 = sbr.rel (%p118) target = $region16
      $region15: #{net_firewall_forward.1} parent=11 // pred_region
        _
      $region16: #{net_firewall_forward.1} parent=11 // pred_fallthru
        _
      // Predicated region
      $region17: #{net_firewall_forward.1} parent=11 // pred_check
        %p121 = pneg %p51
      $region18: #{net_firewall_forward.1} parent=11 // pred_check_branch
        %123 = sbr.rel (%p121) target = $region20
      $region19: #{net_firewall_forward.1} parent=11 // pred_region
        _
      $region20: #{net_firewall_forward.1} parent=11 // pred_fallthru
        _
    $region12: #{net_firewall_forward.1} parent=5 // pred_fallthru
      _
    %p124 = scmp.lt.s32.totalorder %s9, 2
    // Predicated region
    $region21: #{net_firewall_forward.1} parent=5 // pred_check
      %p125 = pneg %p124
    $region22: #{net_firewall_forward.1} parent=5 // pred_check_branch
      %127 = sbr.rel (%p125) target = $region24
    $region23: #{net_firewall_forward.1} parent=5 // pred_region
      // Predicated region
      $region25: #{net_firewall_forward.1} parent=23 // pred_check
        %p128 = pneg %p71
      $region26: #{net_firewall_forward.1} parent=23 // pred_check_branch
        %130 = sbr.rel (%p128) target = $region28
      $region27: #{net_firewall_forward.1} parent=23 // pred_region
        %s131 = smul.u32 16, %s9
        %p132 = scmp.lt.s32.totalorder %s131, 31
        %s133 = scalar_select %p132, %s131, 31
        %s134 = smul.addr %s133, 8
        %s135 = scalar_lea.vmem %s2, %s134
        %s136 = smul.u32 16, %s9
      $region28: #{net_firewall_forward.1} parent=23 // pred_fallthru
        _
    $region24: #{net_firewall_forward.1} parent=5 // pred_fallthru
      _
    %p137 = scmp.le.s32.totalorder 1, %s9
    %p138 = scmp.lt.s32.totalorder %s9, 3
    %p139 = pnand %p137, %p138
    %p140 = pneg %p139
    // Predicated region
    $region29: #{net_firewall_forward.1} parent=5 // pred_check
      _
    $region30: #{net_firewall_forward.1} parent=5 // pred_check_branch
      %142 = sbr.rel (%p139) target = $region32
    $region31: #{net_firewall_forward.1} parent=5 // pred_region
      %s143 = ssub.s32 %s9, 1
      %p144 = pneg %p30
      %p145 = pneg %p27
      %p146 = pneg %p51
      %p147 = pneg %p48
      %s148 = smul.u32 16, %s14
      %p149 = scmp.lt.s32.totalorder %s148, 31
      %s150 = scalar_select %p149, %s148, 31
      %s151 = smul.addr %s150, 8
      %s152 = scalar_lea.vmem %s2, %s151
      %p153 = pneg %p77
      %p154 = pneg %p74
      %p155 = pneg %p103
      %p156 = pneg %p100
      %s157 = smul.u32 16, %s14
      %p158 = scmp.lt.s32.totalorder %s157, 31
      %s159 = scalar_select %p158, %s157, 31
      %s160 = smul.addr %s159, 8
      %s161 = scalar_lea.vmem %s3, %s160
      %s162 = smul.u32 16, %s14
      %p163 = scmp.lt.s32.totalorder %s162, 31
      %s164 = scalar_select %p163, %s162, 31
      %s165 = smul.addr %s164, 8
      %s166 = scalar_lea.vmem %s2, %s165
      %s167 = smul.u32 16, %s14
      %s168 = smul.u32 16, %s14
      %p169 = scmp.lt.s32.totalorder %s168, 31
      %s170 = scalar_select %p169, %s168, 31
      %s171 = smul.addr %s170, 8
      %s172 = scalar_lea.vmem %s3, %s171
      %s173 = smul.u32 16, %s14
      %v174 = vld [vmem:[%s166] sm:$0xff]
      %v175 = vld [vmem:[%s166 + $0x8] sm:$0xff]
      %v176 = vld [vmem:[%s166 + $0x10] sm:$0xff]
      %v177 = vld [vmem:[%s166 + $0x18] sm:$0xff]
      %v178 = vld [vmem:[%s166 + $0x20] sm:$0xff]
      %v179 = vld [vmem:[%s166 + $0x28] sm:$0xff]
      %v180 = vld [vmem:[%s166 + $0x30] sm:$0xff]
      %v181 = vld [vmem:[%s166 + $0x38] sm:$0xff]
      %v182 = vld [vmem:[%s166 + $0x40] sm:$0xff]
      %v183 = vld [vmem:[%s166 + $0x48] sm:$0xff]
      %v184 = vld [vmem:[%s166 + $0x50] sm:$0xff]
      %v185 = vld [vmem:[%s166 + $0x58] sm:$0xff]
      %v186 = vld [vmem:[%s166 + $0x60] sm:$0xff]
      %v187 = vld [vmem:[%s166 + $0x68] sm:$0xff]
      %v188 = vld [vmem:[%s166 + $0x70] sm:$0xff]
      %v189 = vld [vmem:[%s166 + $0x78] sm:$0xff]
      %v190 = vld [vmem:[%s0] sm:$0xff]
      %v191 = vld [vmem:[%s0 + $0x8] sm:$0x7]
      %v192 = vld [vmem:[%s1] sm:$0x1]
      %v194 = vlaneseq
      %v195 = vshrl.u32 %v194, 7
      %v196 = vsub.s32 0, %v195
      %v197 = vrot.slane %v192, %v196
      %vm199 = vcmask 89088
      %v201 = vsel %vm199, %v174, 0
      %v204 = vsel %vm199, %v175, 0
      %v207 = vsel %vm199, %v176, 0
      %v210 = vsel %vm199, %v177, 0
      %v213 = vsel %vm199, %v178, 0
      %v216 = vsel %vm199, %v179, 0
      %v219 = vsel %vm199, %v180, 0
      %v222 = vsel %vm199, %v181, 0
      %v225 = vsel %vm199, %v182, 0
      %v228 = vsel %vm199, %v183, 0
      %v231 = vsel %vm199, %v184, 0
      %v234 = vsel %vm199, %v185, 0
      %v237 = vsel %vm199, %v186, 0
      %v240 = vsel %vm199, %v187, 0
      %v243 = vsel %vm199, %v188, 0
      %v246 = vsel %vm199, %v189, 0
      %vm248 = vcmask 1042432
      %v250 = vsel %vm248, %v191, 0
      %252 = vmatprep.subr.mxu0 0.0
      %253 = vmatpush1.msra.mxu0 %v190
      %254 = vmatprep.subr.mxu0 0.0
      %255 = vmatpush1.msra.mxu0 %v250
      %256 = vmatprep.subr.mxu0 0.0
      %257 = vmatpush1.msra.mxu0 0.0
      %258 = vmatprep.subr.mxu0 0.0
      %259 = vmatpush1.msra.mxu0 0.0
      %260 = vmatprep.subr.mxu0 0.0
      %261 = vmatpush1.msra.mxu0 0.0
      %262 = vmatprep.subr.mxu0 0.0
      %263 = vmatpush1.msra.mxu0 0.0
      %264 = vmatprep.subr.mxu0 0.0
      %265 = vmatpush1.msra.mxu0 0.0
      %266 = vmatprep.subr.mxu0 0.0
      %267 = vmatpush1.msra.mxu0 0.0
      %268 = vmatprep.subr.mxu0 0.0
      %269 = vmatpush1.msra.mxu0 0.0
      %270 = vmatprep.subr.mxu0 0.0
      %271 = vmatpush1.msra.mxu0 0.0
      %272 = vmatprep.subr.mxu0 0.0
      %273 = vmatpush1.msra.mxu0 0.0
      %274 = vmatprep.subr.mxu0 0.0
      %275 = vmatpush1.msra.mxu0 0.0
      %276 = vmatprep.subr.mxu0 0.0
      %277 = vmatpush1.msra.mxu0 0.0
      %278 = vmatprep.subr.mxu0 0.0
      %279 = vmatpush1.msra.mxu0 0.0
      %280 = vmatprep.subr.mxu0 0.0
      %281 = vmatpush1.msra.mxu0 0.0
      %282 = vmatprep.subr.mxu0 0.0
      %283 = vmatpush1.msra.mxu0 0.0
      %284 = vmatprep.subr.mxu0 0.0
      %285 = vmatpush1.msra.mxu0 0.0
      %286 = vmatprep.subr.mxu0 0.0
      %287 = vmatpush1.msra.mxu0 0.0
      %288 = vmatprep.subr.mxu0 0.0
      %289 = vmatpush1.msra.mxu0 0.0
      %290 = vmatprep.subr.mxu0 0.0
      %291 = vmatpush1.msra.mxu0 0.0
      %292 = vmatprep.subr.mxu0 0.0
      %293 = vmatpush1.msra.mxu0 0.0
      %294 = vmatprep.subr.mxu0 0.0
      %295 = vmatpush1.msra.mxu0 0.0
      %296 = vmatprep.subr.mxu0 0.0
      %297 = vmatpush1.msra.mxu0 0.0
      %298 = vmatprep.subr.mxu0 0.0
      %299 = vmatpush1.msra.mxu0 0.0
      %300 = vmatprep.subr.mxu0 0.0
      %301 = vmatpush1.msra.mxu0 0.0
      %302 = vmatprep.subr.mxu0 0.0
      %303 = vmatpush1.msra.mxu0 0.0
      %304 = vmatprep.subr.mxu0 0.0
      %305 = vmatpush1.msra.mxu0 0.0
      %306 = vmatprep.subr.mxu0 0.0
      %307 = vmatpush1.msra.mxu0 0.0
      %308 = vmatprep.subr.mxu0 0.0
      %309 = vmatpush1.msra.mxu0 0.0
      %310 = vmatprep.subr.mxu0 0.0
      %311 = vmatpush1.msra.mxu0 0.0
      %312 = vmatprep.subr.mxu0 0.0
      %313 = vmatpush1.msra.mxu0 0.0
      %314 = vmatprep.subr.mxu0 0.0
      %315 = vmatpush1.msra.mxu0 0.0
      %316 = vmatprep.mubr.f32.mxu0 0.0
      %317 = vmatmul.mubr.f32.gmra.mrb[0].mxu0 %v201
      %v318 = vpop.f32.mrb[0].mxu0
      %v319 = vadd.f32 %v197, %v318
      %v320 = vpop.f32.mrb[0].mxu0
      %321 = vmatprep.mubr.f32.mxu0 0.0
      %322 = vmatmul.mubr.f32.gmra.mrb[0].mxu0 %v204
      %v323 = vpop.f32.mrb[0].mxu0
      %v324 = vadd.f32 %v197, %v323
      %v325 = vpop.f32.mrb[0].mxu0
      %326 = vmatprep.mubr.f32.mxu0 0.0
      %327 = vmatmul.mubr.f32.gmra.mrb[0].mxu0 %v207
      %v328 = vpop.f32.mrb[0].mxu0
      %v329 = vadd.f32 %v197, %v328
      %v330 = vpop.f32.mrb[0].mxu0
      %331 = vmatprep.mubr.f32.mxu0 0.0
      %332 = vmatmul.mubr.f32.gmra.mrb[0].mxu0 %v210
      %v333 = vpop.f32.mrb[0].mxu0
      %v334 = vadd.f32 %v197, %v333
      %v335 = vpop.f32.mrb[0].mxu0
      %336 = vmatprep.mubr.f32.mxu0 0.0
      %337 = vmatmul.mubr.f32.gmra.mrb[0].mxu0 %v213
      %v338 = vpop.f32.mrb[0].mxu0
      %v339 = vadd.f32 %v197, %v338
      %v340 = vpop.f32.mrb[0].mxu0
      %341 = vmatprep.mubr.f32.mxu0 0.0
      %342 = vmatmul.mubr.f32.gmra.mrb[0].mxu0 %v216
      %v343 = vpop.f32.mrb[0].mxu0
      %v344 = vadd.f32 %v197, %v343
      %v345 = vpop.f32.mrb[0].mxu0
      %346 = vmatprep.mubr.f32.mxu0 0.0
      %347 = vmatmul.mubr.f32.gmra.mrb[0].mxu0 %v219
      %v348 = vpop.f32.mrb[0].mxu0
      %v349 = vadd.f32 %v197, %v348
      %v350 = vpop.f32.mrb[0].mxu0
      %351 = vmatprep.mubr.f32.mxu0 0.0
      %352 = vmatmul.mubr.f32.gmra.mrb[0].mxu0 %v222
      %v353 = vpop.f32.mrb[0].mxu0
      %v354 = vadd.f32 %v197, %v353
      %v355 = vpop.f32.mrb[0].mxu0
      %356 = vmatprep.mubr.f32.mxu0 0.0
      %357 = vmatmul.mubr.f32.gmra.mrb[0].mxu0 %v225
      %v358 = vpop.f32.mrb[0].mxu0
      %v359 = vadd.f32 %v197, %v358
      %v360 = vpop.f32.mrb[0].mxu0
      %361 = vmatprep.mubr.f32.mxu0 0.0
      %362 = vmatmul.mubr.f32.gmra.mrb[0].mxu0 %v228
      %v363 = vpop.f32.mrb[0].mxu0
      %v364 = vadd.f32 %v197, %v363
      %v365 = vpop.f32.mrb[0].mxu0
      %366 = vmatprep.mubr.f32.mxu0 0.0
      %367 = vmatmul.mubr.f32.gmra.mrb[0].mxu0 %v231
      %v368 = vpop.f32.mrb[0].mxu0
      %v369 = vadd.f32 %v197, %v368
      %v370 = vpop.f32.mrb[0].mxu0
      %371 = vmatprep.mubr.f32.mxu0 0.0
      %372 = vmatmul.mubr.f32.gmra.mrb[0].mxu0 %v234
      %v373 = vpop.f32.mrb[0].mxu0
      %v374 = vadd.f32 %v197, %v373
      %v375 = vpop.f32.mrb[0].mxu0
      %376 = vmatprep.mubr.f32.mxu0 0.0
      %377 = vmatmul.mubr.f32.gmra.mrb[0].mxu0 %v237
      %v378 = vpop.f32.mrb[0].mxu0
      %v379 = vadd.f32 %v197, %v378
      %v380 = vpop.f32.mrb[0].mxu0
      %381 = vmatprep.mubr.f32.mxu0 0.0
      %382 = vmatmul.mubr.f32.gmra.mrb[0].mxu0 %v240
      %v383 = vpop.f32.mrb[0].mxu0
      %v384 = vadd.f32 %v197, %v383
      %v385 = vpop.f32.mrb[0].mxu0
      %386 = vmatprep.mubr.f32.mxu0 0.0
      %387 = vmatmul.mubr.f32.gmra.mrb[0].mxu0 %v243
      %v388 = vpop.f32.mrb[0].mxu0
      %v389 = vadd.f32 %v197, %v388
      %v390 = vpop.f32.mrb[0].mxu0
      %391 = vmatprep.mubr.f32.mxu0 0.0
      %392 = vmatmul.mubr.f32.gmra.mrb[0].mxu0 %v246
      %v393 = vpop.f32.mrb[0].mxu0
      %v394 = vadd.f32 %v197, %v393
      %v395 = vpop.f32.mrb[0].mxu0
      %396 = vdwg.mxu0
      %vm397 = vcmask 31744
      %398 = vst.msk [vmem:[%s172] sm:$0xff] %vm397, %v319
      %399 = vst.msk [vmem:[%s172 + $0x8] sm:$0xff] %vm397, %v324
      %400 = vst.msk [vmem:[%s172 + $0x10] sm:$0xff] %vm397, %v329
      %401 = vst.msk [vmem:[%s172 + $0x18] sm:$0xff] %vm397, %v334
      %402 = vst.msk [vmem:[%s172 + $0x20] sm:$0xff] %vm397, %v339
      %403 = vst.msk [vmem:[%s172 + $0x28] sm:$0xff] %vm397, %v344
      %404 = vst.msk [vmem:[%s172 + $0x30] sm:$0xff] %vm397, %v349
      %405 = vst.msk [vmem:[%s172 + $0x38] sm:$0xff] %vm397, %v354
      %406 = vst.msk [vmem:[%s172 + $0x40] sm:$0xff] %vm397, %v359
      %407 = vst.msk [vmem:[%s172 + $0x48] sm:$0xff] %vm397, %v364
      %408 = vst.msk [vmem:[%s172 + $0x50] sm:$0xff] %vm397, %v369
      %409 = vst.msk [vmem:[%s172 + $0x58] sm:$0xff] %vm397, %v374
      %410 = vst.msk [vmem:[%s172 + $0x60] sm:$0xff] %vm397, %v379
      %411 = vst.msk [vmem:[%s172 + $0x68] sm:$0xff] %vm397, %v384
      %412 = vst.msk [vmem:[%s172 + $0x70] sm:$0xff] %vm397, %v389
      %413 = vst.msk [vmem:[%s172 + $0x78] sm:$0xff] %vm397, %v394
      %s414 = smul.u32 16, %s14
      %p415 = scmp.lt.s32.totalorder %s414, 31
      %s416 = scalar_select %p415, %s414, 31
      %s417 = smul.addr %s416, 8
      %s418 = scalar_lea.vmem %s3, %s417
      // Predicated region
      $region33: #{net_firewall_forward.1} parent=31 // pred_check
        %p419 = pneg %p100
      $region34: #{net_firewall_forward.1} parent=31 // pred_check_branch
        %421 = sbr.rel (%p419) target = $region36
      $region35: #{net_firewall_forward.1} parent=31 // pred_region
        %s422 = smul.u32 16, %s14
      $region36: #{net_firewall_forward.1} parent=31 // pred_fallthru
        _
    $region32: #{net_firewall_forward.1} parent=5 // pred_fallthru
      _
    %p423 = scmp.le.s32.totalorder 2, %s9
    // Predicated region
    $region37: #{net_firewall_forward.1} parent=5 // pred_check
      %p424 = pneg %p423
    $region38: #{net_firewall_forward.1} parent=5 // pred_check_branch
      %426 = sbr.rel (%p424) target = $region40
    $region39: #{net_firewall_forward.1} parent=5 // pred_region
      %s427 = ssub.s32 %s9, 2
      // Predicated region
      $region41: #{net_firewall_forward.1} parent=39 // pred_check
        %p428 = pneg %p106
      $region42: #{net_firewall_forward.1} parent=39 // pred_check_branch
        %430 = sbr.rel (%p428) target = $region44
      $region43: #{net_firewall_forward.1} parent=39 // pred_region
        %s431 = smul.u32 16, %s15
        %p432 = scmp.lt.s32.totalorder %s431, 31
        %s433 = scalar_select %p432, %s431, 31
        %s434 = smul.addr %s433, 8
        %s435 = scalar_lea.vmem %s3, %s434
      $region44: #{net_firewall_forward.1} parent=39 // pred_fallthru
        _
    $region40: #{net_firewall_forward.1} parent=5 // pred_fallthru
      _
  $region6: #{net_firewall_forward.1} parent=0 // loop_footer
    %s13 = sadd.s32 1, %s9
  $region7: #{net_firewall_forward.1} parent=0 // loop_footer_branch
    %8 = sbr.rel target = $region3
  $region8: #{net_firewall_forward.1} parent=0 // loop_exit
    _

</llo_original>
